<compile_context>
chip_gen: v6e
topology: v6e:2x2x1
jax: 0.10.0
libtpu: 0.0.40
codegen_flags: <defaults>
</compile_context>

<pallas_src>
import functools

import jax
import jax.numpy as jnp
from jax.experimental import pallas as pl
from jax.experimental.pallas import tpu as pltpu

LANE = 128      # vreg lane width / MXU column granularity
SUBLANE = 8     # f32 sublane granularity
MAX_BM = 512    # batch tile cap (big M tiles are nearly free VMEM-wise here)


def _round_up(n, m):
    return (n + m - 1) // m * m


def _supports_bf16_act():
    """bf16 VPU/EUP exists on v6e/v7x; keep f32 activations on v5e and older."""
    try:
        kind = jax.devices()[0].device_kind.lower()
    except Exception:
        return False
    if "tpu" not in kind:
        return False
    return not any(v in kind for v in ("v2", "v3", "v4", "v5"))


_BF16_ACT = _supports_bf16_act()
_SINGLE_BUFFER_WEIGHTS_OK = True  # flipped off once if pl.Buffered(1) is rejected


def _pick_bm(B):
    """Largest lane-aligned batch tile that still gives >= 2 grid steps for
    moderate/large batches (so the 'parallel' axis lands on both v7x TCs)."""
    if B <= LANE:
        return _round_up(B, SUBLANE)
    if B <= 2 * MAX_BM:
        return min(MAX_BM, _round_up((B + 1) // 2, LANE))
    return MAX_BM


def mlp_kernel(x_ref, w1_ref, b1_ref, w2_ref, b2_ref, w3_ref, b3_ref, o_ref,
               *, act_dtype):
    """Fused 3-layer MLP on one batch tile.

    MXU operands are bf16, accumulation is f32 (preferred_element_type), the
    bias add is always f32, and tanh runs in `act_dtype` (bf16 on v6e/v7x,
    f32 on v5e).  Intermediates are kept bf16 to halve vreg/VMEM pressure.
    """
    def layer(h, w_ref, b_ref, out_dtype):
        acc = jnp.dot(h, w_ref[...], preferred_element_type=jnp.float32)
        acc = acc + b_ref[...]                      # bias add in f32
        return jnp.tanh(acc.astype(act_dtype)).astype(out_dtype)

    h1 = layer(x_ref[...], w1_ref, b1_ref, jnp.bfloat16)
    h2 = layer(h1, w2_ref, b2_ref, jnp.bfloat16)
    o_ref[...] = layer(h2, w3_ref, b3_ref, o_ref.dtype)


def prepare_params(params):
    """Zero-pad hidden/output feature dims to multiples of 128, cast weights to
    bf16 (biases stay f32).  Layer-1's K dim (input_size) is left unpadded."""
    def pad2(a, rows, cols, dtype):
        r, c = a.shape
        return jnp.zeros((rows, cols), dtype).at[:r, :c].set(a.astype(dtype))

    in_size, hid = params["w1"].shape
    out_size = params["w3"].shape[1]
    hid_p = _round_up(hid, LANE)
    out_p = _round_up(out_size, LANE)

    padded = {
        "w1": pad2(params["w1"], in_size, hid_p, jnp.bfloat16),
        "b1": pad2(params["b1"], 1, hid_p, jnp.float32),
        "w2": pad2(params["w2"], hid_p, hid_p, jnp.bfloat16),
        "b2": pad2(params["b2"], 1, hid_p, jnp.float32),
        "w3": pad2(params["w3"], hid_p, out_p, jnp.bfloat16),
        "b3": pad2(params["b3"], 1, out_p, jnp.float32),
    }
    return padded, out_size


def mlp_forward(x, pp, out_size):
    """x: [B, input_size] float32. pp: padded params from prepare_params."""
    global _SINGLE_BUFFER_WEIGHTS_OK

    w1, b1, w2, b2, w3, b3 = (pp[k] for k in ("w1", "b1", "w2", "b2", "w3", "b3"))
    B, in_size = x.shape
    assert w1.shape[0] == in_size
    out_p = w3.shape[1]

    bm = _pick_bm(B)
    B_p = _round_up(B, bm)

    # Stream the activations as bf16 (halves per-step DMA); only the batch tail
    # is padded, the feature dim stays at its true extent.
    xb = x.astype(jnp.bfloat16)
    if B_p != B:
        xb = jnp.pad(xb, ((0, B_p - B), (0, 0)))

    kernel = functools.partial(
        mlp_kernel, act_dtype=jnp.bfloat16 if _BF16_ACT else jnp.float32)

    def run(single_buffer_weights):
        def const_spec(a):
            # Constant block index -> weights/biases stay VMEM-resident across
            # batch tiles (fetched once, never re-DMA'd).
            kwargs = {}
            if single_buffer_weights:
                # Block never changes -> a single buffer suffices; halves the
                # weight VMEM footprint (matters on v7x's 64 MiB VMEM).
                kwargs["pipeline_mode"] = pl.Buffered(1)
            return pl.BlockSpec(a.shape, lambda i: (0,) * a.ndim, **kwargs)

        return pl.pallas_call(
            kernel,
            out_shape=jax.ShapeDtypeStruct((B_p, out_p), jnp.float32),
            grid=(B_p // bm,),
            in_specs=[
                pl.BlockSpec((bm, in_size), lambda i: (i, 0)),
                const_spec(w1), const_spec(b1),
                const_spec(w2), const_spec(b2),
                const_spec(w3), const_spec(b3),
            ],
            out_specs=pl.BlockSpec((bm, out_p), lambda i: (i, 0)),
            compiler_params=pltpu.CompilerParams(
                # Batch tiles are independent -> shard across v7x's 2 TCs.
                dimension_semantics=("parallel",),
                # Explicit scoped-VMEM budget (safe on v5e/v6e/v7x); leaves room
                # to grow hidden/bm without tripping the 16/32 MiB defaults.
                vmem_limit_bytes=32 * 1024 * 1024,
            ),
        )(xb, w1, b1, w2, b2, w3, b3)

    if _SINGLE_BUFFER_WEIGHTS_OK:
        try:
            out = run(True)
        except Exception:
            # Older builds may not accept pipeline_mode / Buffered(1); the
            # fallback is identical except weights are double-buffered.
            _SINGLE_BUFFER_WEIGHTS_OK = False
            out = run(False)
    else:
        out = run(False)

    return out[:B, :out_size]


def init_params(key, input_size, hidden_size, output_size):
    """PyTorch nn.Linear-style init; weights stored as [in, out]."""
    k1, k2, k3, k4, k5, k6 = jax.random.split(key, 6)

    def uinit(k, shape, fan_in):
        bound = 1.0 / jnp.sqrt(fan_in)
        return jax.random.uniform(k, shape, jnp.float32, -bound, bound)

    return {
        "w1": uinit(k1, (input_size, hidden_size), input_size),
        "b1": uinit(k2, (1, hidden_size), input_size),
        "w2": uinit(k3, (hidden_size, hidden_size), hidden_size),
        "b2": uinit(k4, (1, hidden_size), hidden_size),
        "w3": uinit(k5, (hidden_size, output_size), hidden_size),
        "b3": uinit(k6, (1, output_size), hidden_size),
    }


if __name__ == "__main__":
    input_size, hidden_size, output_size = 16, 32, 8
    batch = 8

    key = jax.random.PRNGKey(0)
    kx, kp = jax.random.split(key)

    x = jax.random.normal(kx, (batch, input_size), jnp.float32)
    params = init_params(kp, input_size, hidden_size, output_size)
    padded_params, out_size = prepare_params(params)

    out = mlp_forward(x, padded_params, out_size)
    jax.block_until_ready(out)

    # Pure-f32 JAX reference (same math, unpadded weights).
    ref = x
    for w, b in (("w1", "b1"), ("w2", "b2"), ("w3", "b3")):
        ref = jnp.tanh(ref @ params[w] + params[b])

    assert out.shape == (batch, output_size)
    # bf16 MXU operands (+ bf16 tanh on v6e/v7x) -> loosened tolerance vs. f32 ref.
    max_err = float(jnp.max(jnp.abs(out - ref)))
    assert jnp.allclose(out, ref, atol=3e-2, rtol=3e-2), max_err

    print("KERNEL_OK")
</pallas_src>

<mosaic_0001>
module attributes {stable_mosaic.version = 11 : i64} {
  func.func @mlp_kernel(%arg0: i32, %arg1: memref<8x16xbf16, #tpu.memory_space<vmem>>, %arg2: memref<16x128xbf16, #tpu.memory_space<vmem>>, %arg3: memref<1x128xf32, #tpu.memory_space<vmem>>, %arg4: memref<128x128xbf16, #tpu.memory_space<vmem>>, %arg5: memref<1x128xf32, #tpu.memory_space<vmem>>, %arg6: memref<128x128xbf16, #tpu.memory_space<vmem>>, %arg7: memref<1x128xf32, #tpu.memory_space<vmem>>, %arg8: memref<8x128xf32, #tpu.memory_space<vmem>>) attributes {dimension_semantics = [#tpu.dimension_semantics<parallel>], iteration_bounds = array<i64: 1>, scalar_prefetch = 0 : i64, scratch_operands = 0 : i64, tpu.core_type = #tpu.core_type<tc>, window_params = [{transform_indices = @transform_0, window_bounds = array<i64: 8, 16>}, {pipeline_mode = #tpu.pipeline_mode<synchronous>, transform_indices = @transform_1, window_bounds = array<i64: 16, 128>}, {pipeline_mode = #tpu.pipeline_mode<synchronous>, transform_indices = @transform_2, window_bounds = array<i64: 1, 128>}, {pipeline_mode = #tpu.pipeline_mode<synchronous>, transform_indices = @transform_3, window_bounds = array<i64: 128, 128>}, {pipeline_mode = #tpu.pipeline_mode<synchronous>, transform_indices = @transform_4, window_bounds = array<i64: 1, 128>}, {pipeline_mode = #tpu.pipeline_mode<synchronous>, transform_indices = @transform_5, window_bounds = array<i64: 128, 128>}, {pipeline_mode = #tpu.pipeline_mode<synchronous>, transform_indices = @transform_6, window_bounds = array<i64: 1, 128>}, {transform_indices = @transform_7, window_bounds = array<i64: 8, 128>}]} {
    %c0 = arith.constant 0 : index
    %c0_0 = arith.constant 0 : index
    %0 = vector.load %arg1[%c0, %c0_0] : memref<8x16xbf16, #tpu.memory_space<vmem>>, vector<8x16xbf16>
    %c0_1 = arith.constant 0 : index
    %c0_2 = arith.constant 0 : index
    %1 = vector.load %arg2[%c0_1, %c0_2] : memref<16x128xbf16, #tpu.memory_space<vmem>>, vector<16x128xbf16>
    %cst = arith.constant dense<0.000000e+00> : vector<8x128xf32>
    %2 = tpu.matmul %0, %1, %cst {dimension_numbers = #tpu.dot_dimension_numbers<[1], [0], [0], [1], [0, 0, 1, 1], [], []>} : vector<8x16xbf16>, vector<16x128xbf16>, vector<8x128xf32> -> vector<8x128xf32>
    %c0_3 = arith.constant 0 : index
    %c0_4 = arith.constant 0 : index
    %3 = vector.load %arg3[%c0_3, %c0_4] : memref<1x128xf32, #tpu.memory_space<vmem>>, vector<1x128xf32>
    %4 = vector.broadcast %3 : vector<1x128xf32> to vector<8x128xf32>
    %5 = arith.addf %2, %4 : vector<8x128xf32>
    %6 = math.tanh %5 : vector<8x128xf32>
    %7 = arith.truncf %6 : vector<8x128xf32> to vector<8x128xbf16>
    %c0_5 = arith.constant 0 : index
    %c0_6 = arith.constant 0 : index
    %8 = vector.load %arg4[%c0_5, %c0_6] : memref<128x128xbf16, #tpu.memory_space<vmem>>, vector<128x128xbf16>
    %cst_7 = arith.constant dense<0.000000e+00> : vector<8x128xf32>
    %9 = tpu.matmul %7, %8, %cst_7 {dimension_numbers = #tpu.dot_dimension_numbers<[1], [0], [0], [1], [0, 0, 1, 1], [], []>} : vector<8x128xbf16>, vector<128x128xbf16>, vector<8x128xf32> -> vector<8x128xf32>
    %c0_8 = arith.constant 0 : index
    %c0_9 = arith.constant 0 : index
    %10 = vector.load %arg5[%c0_8, %c0_9] : memref<1x128xf32, #tpu.memory_space<vmem>>, vector<1x128xf32>
    %11 = vector.broadcast %10 : vector<1x128xf32> to vector<8x128xf32>
    %12 = arith.addf %9, %11 : vector<8x128xf32>
    %13 = math.tanh %12 : vector<8x128xf32>
    %14 = arith.truncf %13 : vector<8x128xf32> to vector<8x128xbf16>
    %c0_10 = arith.constant 0 : index
    %c0_11 = arith.constant 0 : index
    %15 = vector.load %arg6[%c0_10, %c0_11] : memref<128x128xbf16, #tpu.memory_space<vmem>>, vector<128x128xbf16>
    %cst_12 = arith.constant dense<0.000000e+00> : vector<8x128xf32>
    %16 = tpu.matmul %14, %15, %cst_12 {dimension_numbers = #tpu.dot_dimension_numbers<[1], [0], [0], [1], [0, 0, 1, 1], [], []>} : vector<8x128xbf16>, vector<128x128xbf16>, vector<8x128xf32> -> vector<8x128xf32>
    %c0_13 = arith.constant 0 : index
    %c0_14 = arith.constant 0 : index
    %17 = vector.load %arg7[%c0_13, %c0_14] : memref<1x128xf32, #tpu.memory_space<vmem>>, vector<1x128xf32>
    %18 = vector.broadcast %17 : vector<1x128xf32> to vector<8x128xf32>
    %19 = arith.addf %16, %18 : vector<8x128xf32>
    %20 = math.tanh %19 : vector<8x128xf32>
    %c0_15 = arith.constant 0 : index
    %c0_16 = arith.constant 0 : index
    %21 = vector.load %arg8[%c0_15, %c0_16] : memref<8x128xf32, #tpu.memory_space<vmem>>, vector<8x128xf32>
    tpu.vector_store %arg8[%c0_15, %c0_16], %20 {strides = array<i32>} : memref<8x128xf32, #tpu.memory_space<vmem>>, vector<8x128xf32>,
    return
  }
  func.func @transform_0(%arg0: i32) -> (i32, i32) {
    %c0_i32 = arith.constant 0 : i32
    %c0_i32_0 = arith.constant 0 : i32
    return %arg0, %c0_i32 : i32, i32
  }
  func.func @transform_1(%arg0: i32) -> (i32, i32) {
    %c0_i32 = arith.constant 0 : i32
    %c0_i32_0 = arith.constant 0 : i32
    %c0_i32_1 = arith.constant 0 : i32
    return %c0_i32, %c0_i32_0 : i32, i32
  }
  func.func @transform_2(%arg0: i32) -> (i32, i32) {
    %c0_i32 = arith.constant 0 : i32
    %c0_i32_0 = arith.constant 0 : i32
    %c0_i32_1 = arith.constant 0 : i32
    return %c0_i32, %c0_i32_0 : i32, i32
  }
  func.func @transform_3(%arg0: i32) -> (i32, i32) {
    %c0_i32 = arith.constant 0 : i32
    %c0_i32_0 = arith.constant 0 : i32
    %c0_i32_1 = arith.constant 0 : i32
    return %c0_i32, %c0_i32_0 : i32, i32
  }
  func.func @transform_4(%arg0: i32) -> (i32, i32) {
    %c0_i32 = arith.constant 0 : i32
    %c0_i32_0 = arith.constant 0 : i32
    %c0_i32_1 = arith.constant 0 : i32
    return %c0_i32, %c0_i32_0 : i32, i32
  }
  func.func @transform_5(%arg0: i32) -> (i32, i32) {
    %c0_i32 = arith.constant 0 : i32
    %c0_i32_0 = arith.constant 0 : i32
    %c0_i32_1 = arith.constant 0 : i32
    return %c0_i32, %c0_i32_0 : i32, i32
  }
  func.func @transform_6(%arg0: i32) -> (i32, i32) {
    %c0_i32 = arith.constant 0 : i32
    %c0_i32_0 = arith.constant 0 : i32
    %c0_i32_1 = arith.constant 0 : i32
    return %c0_i32, %c0_i32_0 : i32, i32
  }
  func.func @transform_7(%arg0: i32) -> (i32, i32) {
    %c0_i32 = arith.constant 0 : i32
    %c0_i32_0 = arith.constant 0 : i32
    return %arg0, %c0_i32 : i32, i32
  }
}

module attributes {stable_mosaic.version = 11 : i64} {
  func.func @mlp_kernel(%arg0: i32, %arg1: memref<8x16xbf16, #tpu.memory_space<vmem>>, %arg2: memref<16x128xbf16, #tpu.memory_space<vmem>>, %arg3: memref<1x128xf32, #tpu.memory_space<vmem>>, %arg4: memref<128x128xbf16, #tpu.memory_space<vmem>>, %arg5: memref<1x128xf32, #tpu.memory_space<vmem>>, %arg6: memref<128x128xbf16, #tpu.memory_space<vmem>>, %arg7: memref<1x128xf32, #tpu.memory_space<vmem>>, %arg8: memref<8x128xf32, #tpu.memory_space<vmem>>) attributes {dimension_semantics = [#tpu.dimension_semantics<parallel>], iteration_bounds = array<i64: 1>, scalar_prefetch = 0 : i64, scratch_operands = 0 : i64, tpu.core_type = #tpu.core_type<tc>, window_params = [{transform_indices = @transform_0, window_bounds = array<i64: 8, 16>}, {pipeline_mode = #tpu.pipeline_mode<synchronous>, transform_indices = @transform_1, window_bounds = array<i64: 16, 128>}, {pipeline_mode = #tpu.pipeline_mode<synchronous>, transform_indices = @transform_2, window_bounds = array<i64: 1, 128>}, {pipeline_mode = #tpu.pipeline_mode<synchronous>, transform_indices = @transform_3, window_bounds = array<i64: 128, 128>}, {pipeline_mode = #tpu.pipeline_mode<synchronous>, transform_indices = @transform_4, window_bounds = array<i64: 1, 128>}, {pipeline_mode = #tpu.pipeline_mode<synchronous>, transform_indices = @transform_5, window_bounds = array<i64: 128, 128>}, {pipeline_mode = #tpu.pipeline_mode<synchronous>, transform_indices = @transform_6, window_bounds = array<i64: 1, 128>}, {transform_indices = @transform_7, window_bounds = array<i64: 8, 128>}]} {
    %c0 = arith.constant 0 : index
    %c0_0 = arith.constant 0 : index
    %0 = vector.load %arg1[%c0, %c0_0] : memref<8x16xbf16, #tpu.memory_space<vmem>>, vector<8x16xbf16>
    %c0_1 = arith.constant 0 : index
    %c0_2 = arith.constant 0 : index
    %1 = vector.load %arg2[%c0_1, %c0_2] : memref<16x128xbf16, #tpu.memory_space<vmem>>, vector<16x128xbf16>
    %cst = arith.constant dense<0.000000e+00> : vector<8x128xf32>
    %2 = tpu.matmul %0, %1, %cst {dimension_numbers = #tpu.dot_dimension_numbers<[1], [0], [0], [1], [0, 0, 1, 1], [], []>} : vector<8x16xbf16>, vector<16x128xbf16>, vector<8x128xf32> -> vector<8x128xf32>
    %c0_3 = arith.constant 0 : index
    %c0_4 = arith.constant 0 : index
    %3 = vector.load %arg3[%c0_3, %c0_4] : memref<1x128xf32, #tpu.memory_space<vmem>>, vector<1x128xf32>
    %4 = vector.broadcast %3 : vector<1x128xf32> to vector<8x128xf32>
    %5 = arith.addf %2, %4 : vector<8x128xf32>
    %6 = math.tanh %5 : vector<8x128xf32>
    %7 = arith.truncf %6 : vector<8x128xf32> to vector<8x128xbf16>
    %c0_5 = arith.constant 0 : index
    %c0_6 = arith.constant 0 : index
    %8 = vector.load %arg4[%c0_5, %c0_6] : memref<128x128xbf16, #tpu.memory_space<vmem>>, vector<128x128xbf16>
    %cst_7 = arith.constant dense<0.000000e+00> : vector<8x128xf32>
    %9 = tpu.matmul %7, %8, %cst_7 {dimension_numbers = #tpu.dot_dimension_numbers<[1], [0], [0], [1], [0, 0, 1, 1], [], []>} : vector<8x128xbf16>, vector<128x128xbf16>, vector<8x128xf32> -> vector<8x128xf32>
    %c0_8 = arith.constant 0 : index
    %c0_9 = arith.constant 0 : index
    %10 = vector.load %arg5[%c0_8, %c0_9] : memref<1x128xf32, #tpu.memory_space<vmem>>, vector<1x128xf32>
    %11 = vector.broadcast %10 : vector<1x128xf32> to vector<8x128xf32>
    %12 = arith.addf %9, %11 : vector<8x128xf32>
    %13 = math.tanh %12 : vector<8x128xf32>
    %14 = arith.truncf %13 : vector<8x128xf32> to vector<8x128xbf16>
    %c0_10 = arith.constant 0 : index
    %c0_11 = arith.constant 0 : index
    %15 = vector.load %arg6[%c0_10, %c0_11] : memref<128x128xbf16, #tpu.memory_space<vmem>>, vector<128x128xbf16>
    %cst_12 = arith.constant dense<0.000000e+00> : vector<8x128xf32>
    %16 = tpu.matmul %14, %15, %cst_12 {dimension_numbers = #tpu.dot_dimension_numbers<[1], [0], [0], [1], [0, 0, 1, 1], [], []>} : vector<8x128xbf16>, vector<128x128xbf16>, vector<8x128xf32> -> vector<8x128xf32>
    %c0_13 = arith.constant 0 : index
    %c0_14 = arith.constant 0 : index
    %17 = vector.load %arg7[%c0_13, %c0_14] : memref<1x128xf32, #tpu.memory_space<vmem>>, vector<1x128xf32>
    %18 = vector.broadcast %17 : vector<1x128xf32> to vector<8x128xf32>
    %19 = arith.addf %16, %18 : vector<8x128xf32>
    %20 = math.tanh %19 : vector<8x128xf32>
    %c0_15 = arith.constant 0 : index
    %c0_16 = arith.constant 0 : index
    %21 = vector.load %arg8[%c0_15, %c0_16] : memref<8x128xf32, #tpu.memory_space<vmem>>, vector<8x128xf32>
    tpu.vector_store %arg8[%c0_15, %c0_16], %20 {strides = array<i32>} : memref<8x128xf32, #tpu.memory_space<vmem>>, vector<8x128xf32>,
    return
  }
  func.func @transform_0(%arg0: i32) -> (i32, i32) {
    %c0_i32 = arith.constant 0 : i32
    %c0_i32_0 = arith.constant 0 : i32
    return %arg0, %c0_i32 : i32, i32
  }
  func.func @transform_1(%arg0: i32) -> (i32, i32) {
    %c0_i32 = arith.constant 0 : i32
    %c0_i32_0 = arith.constant 0 : i32
    %c0_i32_1 = arith.constant 0 : i32
    return %c0_i32, %c0_i32_0 : i32, i32
  }
  func.func @transform_2(%arg0: i32) -> (i32, i32) {
    %c0_i32 = arith.constant 0 : i32
    %c0_i32_0 = arith.constant 0 : i32
    %c0_i32_1 = arith.constant 0 : i32
    return %c0_i32, %c0_i32_0 : i32, i32
  }
  func.func @transform_3(%arg0: i32) -> (i32, i32) {
    %c0_i32 = arith.constant 0 : i32
    %c0_i32_0 = arith.constant 0 : i32
    %c0_i32_1 = arith.constant 0 : i32
    return %c0_i32, %c0_i32_0 : i32, i32
  }
  func.func @transform_4(%arg0: i32) -> (i32, i32) {
    %c0_i32 = arith.constant 0 : i32
    %c0_i32_0 = arith.constant 0 : i32
    %c0_i32_1 = arith.constant 0 : i32
    return %c0_i32, %c0_i32_0 : i32, i32
  }
  func.func @transform_5(%arg0: i32) -> (i32, i32) {
    %c0_i32 = arith.constant 0 : i32
    %c0_i32_0 = arith.constant 0 : i32
    %c0_i32_1 = arith.constant 0 : i32
    return %c0_i32, %c0_i32_0 : i32, i32
  }
  func.func @transform_6(%arg0: i32) -> (i32, i32) {
    %c0_i32 = arith.constant 0 : i32
    %c0_i32_0 = arith.constant 0 : i32
    %c0_i32_1 = arith.constant 0 : i32
    return %c0_i32, %c0_i32_0 : i32, i32
  }
  func.func @transform_7(%arg0: i32) -> (i32, i32) {
    %c0_i32 = arith.constant 0 : i32
    %c0_i32_0 = arith.constant 0 : i32
    return %arg0, %c0_i32 : i32, i32
  }
}

</mosaic_0001>

<llo_original>
// kernel: tpu_custom_call.1
$region0: #{tpu_custom_call.1}
  #allocation0 [shape = 'u32[]', space=smem, size = 0x4, offset = 0x4, fixed_abs, tag = 'smem constant byte address 0x4 - core index']
  #allocation1 [shape = 'u32[144,128]{1,0:T(1,128)}', space=vmem, size = 0x12000, scoped, tag = 'internal scratch']
  %s0 = inlined_call_operand.hbm [shape: bf16[8,16], index: 0, kind: input, shape index: {}]
  %s1 = inlined_call_operand.hbm [shape: bf16[16,128], index: 1, kind: input, shape index: {}]
  %s2 = inlined_call_operand.vmem [shape: f32[1,128], index: 2, kind: input, shape index: {}]
  %s3 = inlined_call_operand.hbm [shape: bf16[128,128], index: 3, kind: input, shape index: {}]
  %s4 = inlined_call_operand.vmem [shape: f32[1,128], index: 4, kind: input, shape index: {}]
  %s5 = inlined_call_operand.hbm [shape: bf16[128,128], index: 5, kind: input, shape index: {}]
  %s6 = inlined_call_operand.vmem [shape: f32[1,128], index: 6, kind: input, shape index: {}]
  %s7 = inlined_call_operand.hbm [shape: f32[8,128], index: 7, kind: output, shape index: {}]
  %s8 = sld [smem:[#allocation0]]
  $region54: #{tpu_custom_call.1} parent=0
    _
  %s10 = ssub.s32 1, %s8
  %s11 = scalar_select 0, %s10, %s8
  $region1: #{tpu_custom_call.1} parent=0
    #allocation2 [shape = 'u8[2048]{0}', space=vmem, size = 0x800, scoped, tag = 'input window, operand 0, single buffered']
    #allocation3 [shape = 's32[1]{0}', space=sflag, size = 0x4, scoped, tag = 'scoped memory for tpu_custom_call.1']
    #allocation4 [shape = 's32[1]{0}', space=sflag, size = 0x4, scoped, tag = 'scoped memory for tpu_custom_call.1']
    #allocation5 [shape = 'u8[4096]{0}', space=vmem, size = 0x1000, scoped, tag = 'input window, operand 1, single buffered']
    #allocation6 [shape = 's32[1]{0}', space=sflag, size = 0x4, scoped, tag = 'scoped memory for tpu_custom_call.1']
    #allocation7 [shape = 'u8[32768]{0}', space=vmem, size = 0x8000, scoped, tag = 'input window, operand 3, single buffered']
    #allocation8 [shape = 'u8[32768]{0}', space=vmem, size = 0x8000, scoped, tag = 'input window, operand 5, single buffered']
    #allocation9 [shape = 's32[1]{0}', space=sflag, size = 0x4, scoped, tag = 'scoped memory for tpu_custom_call.1']
    #allocation10 [shape = 'u8[4096]{0}', space=vmem, size = 0x1000, scoped, tag = 'output window, operand 0, single buffered']
    %12 = vsyncpa [#allocation3], 0
    %13 = vsyncpa [#allocation6], 0
    %14 = vsyncpa [#allocation9], 0
    %15 = vsyncpa [#allocation4], 0
    // Predicated region
    $region2: #{tpu_custom_call.1} parent=1 // pred_check
      _
    $region3: #{tpu_custom_call.1} parent=1 // pred_check_branch
      %17 = sbr.rel (0) target = $region5
    $region4: #{tpu_custom_call.1} parent=1 // pred_region
      %s19 = ssub.s32 64, 64
      %20 = vsyncadd [#allocation3], %s19
      %s22 = sshll.u32 [#allocation2], 4
      %s23 = int_to_ptr.vmem [resolvable:$true] %s22
      %25 = dma.hbm_to_vmem [thread:$0]  %s0, 64, %s23, [#allocation3]
    $region5: #{tpu_custom_call.1} parent=1 // pred_fallthru
      _
    // Predicated region
    $region6: #{tpu_custom_call.1} parent=1 // pred_check
      _
    $region7: #{tpu_custom_call.1} parent=1 // pred_check_branch
      %27 = sbr.rel (0) target = $region9
    $region8: #{tpu_custom_call.1} parent=1 // pred_region
      %s29 = ssub.s32 128, 128
      %30 = vsyncadd [#allocation6], %s29
      %s31 = sshll.u32 [#allocation5], 4
      %s32 = int_to_ptr.vmem [resolvable:$true] %s31
      %37 = dma.hbm_to_vmem [thread:$0]  %s1, 128, %s32, [#allocation6], 64, 64, 4
    $region9: #{tpu_custom_call.1} parent=1 // pred_fallthru
      _
    // Predicated region
    $region10: #{tpu_custom_call.1} parent=1 // pred_check
      _
    $region11: #{tpu_custom_call.1} parent=1 // pred_check_branch
      %39 = sbr.rel (0) target = $region13
    $region12: #{tpu_custom_call.1} parent=1 // pred_region
      _
    $region13: #{tpu_custom_call.1} parent=1 // pred_fallthru
      _
    // Predicated region
    $region14: #{tpu_custom_call.1} parent=1 // pred_check
      _
    $region15: #{tpu_custom_call.1} parent=1 // pred_check_branch
      %41 = sbr.rel (0) target = $region17
    $region16: #{tpu_custom_call.1} parent=1 // pred_region
      %s43 = ssub.s32 1024, 1024
      %44 = vsyncadd [#allocation6], %s43
      %s45 = sshll.u32 [#allocation7], 4
      %s46 = int_to_ptr.vmem [resolvable:$true] %s45
      %51 = dma.hbm_to_vmem [thread:$0]  %s3, 1024, %s46, [#allocation6], 64, 64, 4
    $region17: #{tpu_custom_call.1} parent=1 // pred_fallthru
      _
    // Predicated region
    $region18: #{tpu_custom_call.1} parent=1 // pred_check
      _
    $region19: #{tpu_custom_call.1} parent=1 // pred_check_branch
      %53 = sbr.rel (0) target = $region21
    $region20: #{tpu_custom_call.1} parent=1 // pred_region
      _
    $region21: #{tpu_custom_call.1} parent=1 // pred_fallthru
      _
    // Predicated region
    $region22: #{tpu_custom_call.1} parent=1 // pred_check
      _
    $region23: #{tpu_custom_call.1} parent=1 // pred_check_branch
      %55 = sbr.rel (0) target = $region25
    $region24: #{tpu_custom_call.1} parent=1 // pred_region
      %s57 = ssub.s32 1024, 1024
      %58 = vsyncadd [#allocation9], %s57
      %s59 = sshll.u32 [#allocation8], 4
      %s60 = int_to_ptr.vmem [resolvable:$true] %s59
      %65 = dma.hbm_to_vmem [thread:$0]  %s5, 1024, %s60, [#allocation9], 64, 64, 4
    $region25: #{tpu_custom_call.1} parent=1 // pred_fallthru
      _
    // Predicated region
    $region26: #{tpu_custom_call.1} parent=1 // pred_check
      _
    $region27: #{tpu_custom_call.1} parent=1 // pred_check_branch
      %67 = sbr.rel (0) target = $region29
    $region28: #{tpu_custom_call.1} parent=1 // pred_region
      _
    $region29: #{tpu_custom_call.1} parent=1 // pred_fallthru
      _
    // Predicated region
    $region30: #{tpu_custom_call.1} parent=1 // pred_check
      _
    $region31: #{tpu_custom_call.1} parent=1 // pred_check_branch
      %69 = sbr.rel (0) target = $region33
    $region32: #{tpu_custom_call.1} parent=1 // pred_region
      %70 = dma.done [#allocation3], 64
    $region33: #{tpu_custom_call.1} parent=1 // pred_fallthru
      _
    // Predicated region
    $region34: #{tpu_custom_call.1} parent=1 // pred_check
      _
    $region35: #{tpu_custom_call.1} parent=1 // pred_check_branch
      %72 = sbr.rel (0) target = $region37
    $region36: #{tpu_custom_call.1} parent=1 // pred_region
      %73 = dma.done [#allocation6], 128
    $region37: #{tpu_custom_call.1} parent=1 // pred_fallthru
      _
    // Predicated region
    $region38: #{tpu_custom_call.1} parent=1 // pred_check
      _
    $region39: #{tpu_custom_call.1} parent=1 // pred_check_branch
      %75 = sbr.rel (0) target = $region41
    $region40: #{tpu_custom_call.1} parent=1 // pred_region
      %76 = dma.done [#allocation6], 1024
    $region41: #{tpu_custom_call.1} parent=1 // pred_fallthru
      _
    // Predicated region
    $region42: #{tpu_custom_call.1} parent=1 // pred_check
      _
    $region43: #{tpu_custom_call.1} parent=1 // pred_check_branch
      %78 = sbr.rel (0) target = $region45
    $region44: #{tpu_custom_call.1} parent=1 // pred_region
      %79 = dma.done [#allocation9], 1024
    $region45: #{tpu_custom_call.1} parent=1 // pred_fallthru
      _
    %v81 = vld [vmem:[#allocation2] sm:$0xf]
    %v82 = vld [vmem:[#allocation5] sm:$0xf]
    %v83 = vld [vmem:[#allocation5 + $0x4] sm:$0xf]
    %v84 = vld [vmem:[%s2] sm:$0x1]
    %v86 = vlaneseq
    %v87 = vshrl.u32 %v86, 7
    %v88 = vsub.s32 0, %v87
    %v89 = vrot.slane %v84, %v88
    %v93 = vunpack.c.l.b16 %v82
    %v94 = vunpack.c.l.b16 %v83
    %v95 = vpack.c.b16 %v94, %v93
    %vm97 = vcmask 130048
    %v99 = vsel %vm97, %v81, 0
    %101 = vmatprep.subr.bf16.mxu0 0
    %102 = vmatpush1.bf16.msra.mxu0 0
    %103 = vmatprep.subr.bf16.mxu0 0
    %104 = vmatpush1.bf16.msra.mxu0 0
    %105 = vmatprep.subr.bf16.mxu0 0
    %106 = vmatpush1.bf16.msra.mxu0 0
    %107 = vmatprep.subr.bf16.mxu0 0
    %108 = vmatpush1.bf16.msra.mxu0 0
    %109 = vmatprep.subr.bf16.mxu0 0
    %110 = vmatpush1.bf16.msra.mxu0 0
    %111 = vmatprep.subr.bf16.mxu0 0
    %112 = vmatpush1.bf16.msra.mxu0 0
    %113 = vmatprep.subr.bf16.mxu0 0
    %114 = vmatpush1.bf16.msra.mxu0 0
    %115 = vmatprep.subr.bf16.mxu0 0
    %116 = vmatpush1.bf16.msra.mxu0 %v95
    %117 = vmatprep.subr.bf16.mxu0 0
    %118 = vmatpush2.bf16.msra.mxu0 0
    %119 = vmatprep.subr.bf16.mxu0 0
    %120 = vmatpush2.bf16.msra.mxu0 0
    %121 = vmatprep.subr.bf16.mxu0 0
    %122 = vmatpush2.bf16.msra.mxu0 0
    %123 = vmatprep.subr.bf16.mxu0 0
    %124 = vmatpush2.bf16.msra.mxu0 0
    %125 = vmatprep.subr.bf16.mxu0 0
    %126 = vmatpush2.bf16.msra.mxu0 0
    %127 = vmatprep.subr.bf16.mxu0 0
    %128 = vmatpush2.bf16.msra.mxu0 0
    %129 = vmatprep.subr.bf16.mxu0 0
    %130 = vmatpush2.bf16.msra.mxu0 0
    %131 = vmatprep.subr.bf16.mxu0 0
    %132 = vmatpush2.bf16.msra.mxu0 0
    %133 = vmatprep.mubr.bf16.mxu0 0
    %134 = vmatmul.mubr.bf16.gmra.mxu0 %v99
    %v135 = vpop.f32.mrf.mxu0
    %v136 = vadd.f32 %v89, %v135
    %v137 = vpop.f32.mrf.mxu0
    %v138 = vpop.f32.mrf.mxu0
    %v139 = vpop.f32.mrf.mxu0
    %140 = vdwg.mxu0
    %v141 = vtanh.pop %v136
    %v142 = vpack.c.bf16 %v141, %v141
    %v143 = vld [vmem:[#allocation7] sm:$0xf]
    %v144 = vld [vmem:[#allocation7 + $0x4] sm:$0xf]
    %v145 = vld [vmem:[#allocation7 + $0x8] sm:$0xf]
    %v146 = vld [vmem:[#allocation7 + $0xc] sm:$0xf]
    %v147 = vld [vmem:[#allocation7 + $0x10] sm:$0xf]
    %v148 = vld [vmem:[#allocation7 + $0x14] sm:$0xf]
    %v149 = vld [vmem:[#allocation7 + $0x18] sm:$0xf]
    %v150 = vld [vmem:[#allocation7 + $0x1c] sm:$0xf]
    %v151 = vld [vmem:[#allocation7 + $0x20] sm:$0xf]
    %v152 = vld [vmem:[#allocation7 + $0x24] sm:$0xf]
    %v153 = vld [vmem:[#allocation7 + $0x28] sm:$0xf]
    %v154 = vld [vmem:[#allocation7 + $0x2c] sm:$0xf]
    %v155 = vld [vmem:[#allocation7 + $0x30] sm:$0xf]
    %v156 = vld [vmem:[#allocation7 + $0x34] sm:$0xf]
    %v157 = vld [vmem:[#allocation7 + $0x38] sm:$0xf]
    %v158 = vld [vmem:[#allocation7 + $0x3c] sm:$0xf]
    %v159 = vld [vmem:[%s4] sm:$0x1]
    %v161 = vlaneseq
    %v162 = vshrl.u32 %v161, 7
    %v163 = vsub.s32 0, %v162
    %v164 = vrot.slane %v159, %v163
    %v182 = vunpack.c.l.b16 %v143
    %v183 = vunpack.c.l.b16 %v144
    %v184 = vunpack.c.l.b16 %v145
    %v185 = vunpack.c.l.b16 %v146
    %v186 = vunpack.c.l.b16 %v147
    %v187 = vunpack.c.l.b16 %v148
    %v188 = vunpack.c.l.b16 %v149
    %v189 = vunpack.c.l.b16 %v150
    %v190 = vunpack.c.l.b16 %v151
    %v191 = vunpack.c.l.b16 %v152
    %v192 = vunpack.c.l.b16 %v153
    %v193 = vunpack.c.l.b16 %v154
    %v194 = vunpack.c.l.b16 %v155
    %v195 = vunpack.c.l.b16 %v156
    %v196 = vunpack.c.l.b16 %v157
    %v197 = vunpack.c.l.b16 %v158
    %v198 = vpack.c.b16 %v183, %v182
    %v199 = vpack.c.b16 %v185, %v184
    %v200 = vpack.c.b16 %v187, %v186
    %v201 = vpack.c.b16 %v189, %v188
    %v202 = vpack.c.b16 %v191, %v190
    %v203 = vpack.c.b16 %v193, %v192
    %v204 = vpack.c.b16 %v195, %v194
    %v205 = vpack.c.b16 %v197, %v196
    %214 = vmatprep.subr.bf16.mxu0 0
    %215 = vmatpush1.bf16.msra.mxu0 %v205
    %216 = vmatprep.subr.bf16.mxu0 0
    %217 = vmatpush1.bf16.msra.mxu0 %v204
    %218 = vmatprep.subr.bf16.mxu0 0
    %219 = vmatpush1.bf16.msra.mxu0 %v203
    %220 = vmatprep.subr.bf16.mxu0 0
    %221 = vmatpush1.bf16.msra.mxu0 %v202
    %222 = vmatprep.subr.bf16.mxu0 0
    %223 = vmatpush1.bf16.msra.mxu0 %v201
    %224 = vmatprep.subr.bf16.mxu0 0
    %225 = vmatpush1.bf16.msra.mxu0 %v200
    %226 = vmatprep.subr.bf16.mxu0 0
    %227 = vmatpush1.bf16.msra.mxu0 %v199
    %228 = vmatprep.subr.bf16.mxu0 0
    %229 = vmatpush1.bf16.msra.mxu0 %v198
    %230 = vmatprep.subr.bf16.mxu0 0
    %231 = vmatpush2.bf16.msra.mxu0 0
    %232 = vmatprep.subr.bf16.mxu0 0
    %233 = vmatpush2.bf16.msra.mxu0 0
    %234 = vmatprep.subr.bf16.mxu0 0
    %235 = vmatpush2.bf16.msra.mxu0 0
    %236 = vmatprep.subr.bf16.mxu0 0
    %237 = vmatpush2.bf16.msra.mxu0 0
    %238 = vmatprep.subr.bf16.mxu0 0
    %239 = vmatpush2.bf16.msra.mxu0 0
    %240 = vmatprep.subr.bf16.mxu0 0
    %241 = vmatpush2.bf16.msra.mxu0 0
    %242 = vmatprep.subr.bf16.mxu0 0
    %243 = vmatpush2.bf16.msra.mxu0 0
    %244 = vmatprep.subr.bf16.mxu0 0
    %245 = vmatpush2.bf16.msra.mxu0 0
    %246 = vmatprep.mubr.bf16.mxu0 0
    %247 = vmatmul.mubr.bf16.gmra.mxu0 %v142
    %v248 = vpop.f32.mrf.mxu0
    %v249 = vadd.f32 %v164, %v248
    %v250 = vpop.f32.mrf.mxu0
    %v251 = vpop.f32.mrf.mxu0
    %v252 = vpop.f32.mrf.mxu0
    %253 = vdwg.mxu0
    %v254 = vtanh.pop %v249
    %v255 = vpack.c.bf16 %v254, %v254
    %v256 = vld [vmem:[#allocation8] sm:$0xf]
    %v257 = vld [vmem:[#allocation8 + $0x4] sm:$0xf]
    %v258 = vld [vmem:[#allocation8 + $0x8] sm:$0xf]
    %v259 = vld [vmem:[#allocation8 + $0xc] sm:$0xf]
    %v260 = vld [vmem:[#allocation8 + $0x10] sm:$0xf]
    %v261 = vld [vmem:[#allocation8 + $0x14] sm:$0xf]
    %v262 = vld [vmem:[#allocation8 + $0x18] sm:$0xf]
    %v263 = vld [vmem:[#allocation8 + $0x1c] sm:$0xf]
    %v264 = vld [vmem:[#allocation8 + $0x20] sm:$0xf]
    %v265 = vld [vmem:[#allocation8 + $0x24] sm:$0xf]
    %v266 = vld [vmem:[#allocation8 + $0x28] sm:$0xf]
    %v267 = vld [vmem:[#allocation8 + $0x2c] sm:$0xf]
    %v268 = vld [vmem:[#allocation8 + $0x30] sm:$0xf]
    %v269 = vld [vmem:[#allocation8 + $0x34] sm:$0xf]
    %v270 = vld [vmem:[#allocation8 + $0x38] sm:$0xf]
    %v271 = vld [vmem:[#allocation8 + $0x3c] sm:$0xf]
    %v272 = vld [vmem:[%s6] sm:$0x1]
    %v274 = vlaneseq
    %v275 = vshrl.u32 %v274, 7
    %v276 = vsub.s32 0, %v275
    %v277 = vrot.slane %v272, %v276
    %v295 = vunpack.c.l.b16 %v256
    %v296 = vunpack.c.l.b16 %v257
    %v297 = vunpack.c.l.b16 %v258
    %v298 = vunpack.c.l.b16 %v259
    %v299 = vunpack.c.l.b16 %v260
    %v300 = vunpack.c.l.b16 %v261
    %v301 = vunpack.c.l.b16 %v262
    %v302 = vunpack.c.l.b16 %v263
    %v303 = vunpack.c.l.b16 %v264
    %v304 = vunpack.c.l.b16 %v265
    %v305 = vunpack.c.l.b16 %v266
    %v306 = vunpack.c.l.b16 %v267
    %v307 = vunpack.c.l.b16 %v268
    %v308 = vunpack.c.l.b16 %v269
    %v309 = vunpack.c.l.b16 %v270
    %v310 = vunpack.c.l.b16 %v271
    %v311 = vpack.c.b16 %v296, %v295
    %v312 = vpack.c.b16 %v298, %v297
    %v313 = vpack.c.b16 %v300, %v299
    %v314 = vpack.c.b16 %v302, %v301
    %v315 = vpack.c.b16 %v304, %v303
    %v316 = vpack.c.b16 %v306, %v305
    %v317 = vpack.c.b16 %v308, %v307
    %v318 = vpack.c.b16 %v310, %v309
    %327 = vmatprep.subr.bf16.mxu0 0
    %328 = vmatpush1.bf16.msra.mxu0 %v318
    %329 = vmatprep.subr.bf16.mxu0 0
    %330 = vmatpush1.bf16.msra.mxu0 %v317
    %331 = vmatprep.subr.bf16.mxu0 0
    %332 = vmatpush1.bf16.msra.mxu0 %v316
    %333 = vmatprep.subr.bf16.mxu0 0
    %334 = vmatpush1.bf16.msra.mxu0 %v315
    %335 = vmatprep.subr.bf16.mxu0 0
    %336 = vmatpush1.bf16.msra.mxu0 %v314
    %337 = vmatprep.subr.bf16.mxu0 0
    %338 = vmatpush1.bf16.msra.mxu0 %v313
    %339 = vmatprep.subr.bf16.mxu0 0
    %340 = vmatpush1.bf16.msra.mxu0 %v312
    %341 = vmatprep.subr.bf16.mxu0 0
    %342 = vmatpush1.bf16.msra.mxu0 %v311
    %343 = vmatprep.subr.bf16.mxu0 0
    %344 = vmatpush2.bf16.msra.mxu0 0
    %345 = vmatprep.subr.bf16.mxu0 0
    %346 = vmatpush2.bf16.msra.mxu0 0
    %347 = vmatprep.subr.bf16.mxu0 0
    %348 = vmatpush2.bf16.msra.mxu0 0
    %349 = vmatprep.subr.bf16.mxu0 0
    %350 = vmatpush2.bf16.msra.mxu0 0
    %351 = vmatprep.subr.bf16.mxu0 0
    %352 = vmatpush2.bf16.msra.mxu0 0
    %353 = vmatprep.subr.bf16.mxu0 0
    %354 = vmatpush2.bf16.msra.mxu0 0
    %355 = vmatprep.subr.bf16.mxu0 0
    %356 = vmatpush2.bf16.msra.mxu0 0
    %357 = vmatprep.subr.bf16.mxu0 0
    %358 = vmatpush2.bf16.msra.mxu0 0
    %359 = vmatprep.mubr.bf16.mxu0 0
    %360 = vmatmul.mubr.bf16.gmra.mxu0 %v255
    %v361 = vpop.f32.mrf.mxu0
    %v362 = vadd.f32 %v277, %v361
    %v363 = vpop.f32.mrf.mxu0
    %v364 = vpop.f32.mrf.mxu0
    %v365 = vpop.f32.mrf.mxu0
    %366 = vdwg.mxu0
    %v367 = vtanh.pop %v362
    %368 = vst [vmem:[#allocation10] sm:$0xff] %v367
    // Predicated region
    $region46: #{tpu_custom_call.1} parent=1 // pred_check
      _
    $region47: #{tpu_custom_call.1} parent=1 // pred_check_branch
      %370 = sbr.rel (0) target = $region49
    $region48: #{tpu_custom_call.1} parent=1 // pred_region
      %s372 = ssub.s32 128, 128
      %373 = vsyncadd [#allocation4], %s372
      %s375 = sshll.u32 [#allocation10], 4
      %s376 = int_to_ptr.vmem [resolvable:$true] %s375
      %378 = dma.vmem_to_hbm [thread:$0]  %s376, 128, %s7, [#allocation4]
    $region49: #{tpu_custom_call.1} parent=1 // pred_fallthru
      _
    // Predicated region
    $region50: #{tpu_custom_call.1} parent=1 // pred_check
      _
    $region51: #{tpu_custom_call.1} parent=1 // pred_check_branch
      %380 = sbr.rel (0) target = $region53
    $region52: #{tpu_custom_call.1} parent=1 // pred_region
      %381 = dma.done [#allocation4], 128
    $region53: #{tpu_custom_call.1} parent=1 // pred_fallthru
      _
    %382 = vsyncpa [#allocation3], 1
    %383 = vsyncpa [#allocation6], 1
    %384 = vsyncpa [#allocation9], 1
    %385 = vsyncpa [#allocation4], 1

// kernel: tpu_custom_call.1
$region0: #{tpu_custom_call.1}
  #allocation0 [shape = 'u32[]', space=smem, size = 0x4, offset = 0x4, fixed_abs, tag = 'smem constant byte address 0x4 - core index']
  #allocation1 [shape = 'u32[144,128]{1,0:T(1,128)}', space=vmem, size = 0x12000, scoped, tag = 'internal scratch']
  %s0 = inlined_call_operand.hbm [shape: bf16[8,16], index: 0, kind: input, shape index: {}]
  %s1 = inlined_call_operand.hbm [shape: bf16[16,128], index: 1, kind: input, shape index: {}]
  %s2 = inlined_call_operand.vmem [shape: f32[1,128], index: 2, kind: input, shape index: {}]
  %s3 = inlined_call_operand.hbm [shape: bf16[128,128], index: 3, kind: input, shape index: {}]
  %s4 = inlined_call_operand.vmem [shape: f32[1,128], index: 4, kind: input, shape index: {}]
  %s5 = inlined_call_operand.hbm [shape: bf16[128,128], index: 5, kind: input, shape index: {}]
  %s6 = inlined_call_operand.vmem [shape: f32[1,128], index: 6, kind: input, shape index: {}]
  %s7 = inlined_call_operand.hbm [shape: f32[8,128], index: 7, kind: output, shape index: {}]
  %s8 = sld [smem:[#allocation0]]
  $region54: #{tpu_custom_call.1} parent=0
    _
  %s10 = ssub.s32 1, %s8
  %s11 = scalar_select 0, %s10, %s8
  $region1: #{tpu_custom_call.1} parent=0
    #allocation2 [shape = 'u8[2048]{0}', space=vmem, size = 0x800, scoped, tag = 'input window, operand 0, single buffered']
    #allocation3 [shape = 's32[1]{0}', space=sflag, size = 0x4, scoped, tag = 'scoped memory for tpu_custom_call.1']
    #allocation4 [shape = 's32[1]{0}', space=sflag, size = 0x4, scoped, tag = 'scoped memory for tpu_custom_call.1']
    #allocation5 [shape = 'u8[4096]{0}', space=vmem, size = 0x1000, scoped, tag = 'input window, operand 1, single buffered']
    #allocation6 [shape = 's32[1]{0}', space=sflag, size = 0x4, scoped, tag = 'scoped memory for tpu_custom_call.1']
    #allocation7 [shape = 'u8[32768]{0}', space=vmem, size = 0x8000, scoped, tag = 'input window, operand 3, single buffered']
    #allocation8 [shape = 'u8[32768]{0}', space=vmem, size = 0x8000, scoped, tag = 'input window, operand 5, single buffered']
    #allocation9 [shape = 's32[1]{0}', space=sflag, size = 0x4, scoped, tag = 'scoped memory for tpu_custom_call.1']
    #allocation10 [shape = 'u8[4096]{0}', space=vmem, size = 0x1000, scoped, tag = 'output window, operand 0, single buffered']
    %12 = vsyncpa [#allocation3], 0
    %13 = vsyncpa [#allocation6], 0
    %14 = vsyncpa [#allocation9], 0
    %15 = vsyncpa [#allocation4], 0
    // Predicated region
    $region2: #{tpu_custom_call.1} parent=1 // pred_check
      _
    $region3: #{tpu_custom_call.1} parent=1 // pred_check_branch
      %17 = sbr.rel (0) target = $region5
    $region4: #{tpu_custom_call.1} parent=1 // pred_region
      %s19 = ssub.s32 64, 64
      %20 = vsyncadd [#allocation3], %s19
      %s22 = sshll.u32 [#allocation2], 4
      %s23 = int_to_ptr.vmem [resolvable:$true] %s22
      %25 = dma.hbm_to_vmem [thread:$0]  %s0, 64, %s23, [#allocation3]
    $region5: #{tpu_custom_call.1} parent=1 // pred_fallthru
      _
    // Predicated region
    $region6: #{tpu_custom_call.1} parent=1 // pred_check
      _
    $region7: #{tpu_custom_call.1} parent=1 // pred_check_branch
      %27 = sbr.rel (0) target = $region9
    $region8: #{tpu_custom_call.1} parent=1 // pred_region
      %s29 = ssub.s32 128, 128
      %30 = vsyncadd [#allocation6], %s29
      %s31 = sshll.u32 [#allocation5], 4
      %s32 = int_to_ptr.vmem [resolvable:$true] %s31
      %37 = dma.hbm_to_vmem [thread:$0]  %s1, 128, %s32, [#allocation6], 64, 64, 4
    $region9: #{tpu_custom_call.1} parent=1 // pred_fallthru
      _
    // Predicated region
    $region10: #{tpu_custom_call.1} parent=1 // pred_check
      _
    $region11: #{tpu_custom_call.1} parent=1 // pred_check_branch
      %39 = sbr.rel (0) target = $region13
    $region12: #{tpu_custom_call.1} parent=1 // pred_region
      _
    $region13: #{tpu_custom_call.1} parent=1 // pred_fallthru
      _
    // Predicated region
    $region14: #{tpu_custom_call.1} parent=1 // pred_check
      _
    $region15: #{tpu_custom_call.1} parent=1 // pred_check_branch
      %41 = sbr.rel (0) target = $region17
    $region16: #{tpu_custom_call.1} parent=1 // pred_region
      %s43 = ssub.s32 1024, 1024
      %44 = vsyncadd [#allocation6], %s43
      %s45 = sshll.u32 [#allocation7], 4
      %s46 = int_to_ptr.vmem [resolvable:$true] %s45
      %51 = dma.hbm_to_vmem [thread:$0]  %s3, 1024, %s46, [#allocation6], 64, 64, 4
    $region17: #{tpu_custom_call.1} parent=1 // pred_fallthru
      _
    // Predicated region
    $region18: #{tpu_custom_call.1} parent=1 // pred_check
      _
    $region19: #{tpu_custom_call.1} parent=1 // pred_check_branch
      %53 = sbr.rel (0) target = $region21
    $region20: #{tpu_custom_call.1} parent=1 // pred_region
      _
    $region21: #{tpu_custom_call.1} parent=1 // pred_fallthru
      _
    // Predicated region
    $region22: #{tpu_custom_call.1} parent=1 // pred_check
      _
    $region23: #{tpu_custom_call.1} parent=1 // pred_check_branch
      %55 = sbr.rel (0) target = $region25
    $region24: #{tpu_custom_call.1} parent=1 // pred_region
      %s57 = ssub.s32 1024, 1024
      %58 = vsyncadd [#allocation9], %s57
      %s59 = sshll.u32 [#allocation8], 4
      %s60 = int_to_ptr.vmem [resolvable:$true] %s59
      %65 = dma.hbm_to_vmem [thread:$0]  %s5, 1024, %s60, [#allocation9], 64, 64, 4
    $region25: #{tpu_custom_call.1} parent=1 // pred_fallthru
      _
    // Predicated region
    $region26: #{tpu_custom_call.1} parent=1 // pred_check
      _
    $region27: #{tpu_custom_call.1} parent=1 // pred_check_branch
      %67 = sbr.rel (0) target = $region29
    $region28: #{tpu_custom_call.1} parent=1 // pred_region
      _
    $region29: #{tpu_custom_call.1} parent=1 // pred_fallthru
      _
    // Predicated region
    $region30: #{tpu_custom_call.1} parent=1 // pred_check
      _
    $region31: #{tpu_custom_call.1} parent=1 // pred_check_branch
      %69 = sbr.rel (0) target = $region33
    $region32: #{tpu_custom_call.1} parent=1 // pred_region
      %70 = dma.done [#allocation3], 64
    $region33: #{tpu_custom_call.1} parent=1 // pred_fallthru
      _
    // Predicated region
    $region34: #{tpu_custom_call.1} parent=1 // pred_check
      _
    $region35: #{tpu_custom_call.1} parent=1 // pred_check_branch
      %72 = sbr.rel (0) target = $region37
    $region36: #{tpu_custom_call.1} parent=1 // pred_region
      %73 = dma.done [#allocation6], 128
    $region37: #{tpu_custom_call.1} parent=1 // pred_fallthru
      _
    // Predicated region
    $region38: #{tpu_custom_call.1} parent=1 // pred_check
      _
    $region39: #{tpu_custom_call.1} parent=1 // pred_check_branch
      %75 = sbr.rel (0) target = $region41
    $region40: #{tpu_custom_call.1} parent=1 // pred_region
      %76 = dma.done [#allocation6], 1024
    $region41: #{tpu_custom_call.1} parent=1 // pred_fallthru
      _
    // Predicated region
    $region42: #{tpu_custom_call.1} parent=1 // pred_check
      _
    $region43: #{tpu_custom_call.1} parent=1 // pred_check_branch
      %78 = sbr.rel (0) target = $region45
    $region44: #{tpu_custom_call.1} parent=1 // pred_region
      %79 = dma.done [#allocation9], 1024
    $region45: #{tpu_custom_call.1} parent=1 // pred_fallthru
      _
    %v81 = vld [vmem:[#allocation2] sm:$0xf]
    %v82 = vld [vmem:[#allocation5] sm:$0xf]
    %v83 = vld [vmem:[#allocation5 + $0x4] sm:$0xf]
    %v84 = vld [vmem:[%s2] sm:$0x1]
    %v86 = vlaneseq
    %v87 = vshrl.u32 %v86, 7
    %v88 = vsub.s32 0, %v87
    %v89 = vrot.slane %v84, %v88
    %v93 = vunpack.c.l.b16 %v82
    %v94 = vunpack.c.l.b16 %v83
    %v95 = vpack.c.b16 %v94, %v93
    %vm97 = vcmask 130048
    %v99 = vsel %vm97, %v81, 0
    %101 = vmatprep.subr.bf16.mxu0 0
    %102 = vmatpush1.bf16.msra.mxu0 0
    %103 = vmatprep.subr.bf16.mxu0 0
    %104 = vmatpush1.bf16.msra.mxu0 0
    %105 = vmatprep.subr.bf16.mxu0 0
    %106 = vmatpush1.bf16.msra.mxu0 0
    %107 = vmatprep.subr.bf16.mxu0 0
    %108 = vmatpush1.bf16.msra.mxu0 0
    %109 = vmatprep.subr.bf16.mxu0 0
    %110 = vmatpush1.bf16.msra.mxu0 0
    %111 = vmatprep.subr.bf16.mxu0 0
    %112 = vmatpush1.bf16.msra.mxu0 0
    %113 = vmatprep.subr.bf16.mxu0 0
    %114 = vmatpush1.bf16.msra.mxu0 0
    %115 = vmatprep.subr.bf16.mxu0 0
    %116 = vmatpush1.bf16.msra.mxu0 %v95
    %117 = vmatprep.subr.bf16.mxu0 0
    %118 = vmatpush2.bf16.msra.mxu0 0
    %119 = vmatprep.subr.bf16.mxu0 0
    %120 = vmatpush2.bf16.msra.mxu0 0
    %121 = vmatprep.subr.bf16.mxu0 0
    %122 = vmatpush2.bf16.msra.mxu0 0
    %123 = vmatprep.subr.bf16.mxu0 0
    %124 = vmatpush2.bf16.msra.mxu0 0
    %125 = vmatprep.subr.bf16.mxu0 0
    %126 = vmatpush2.bf16.msra.mxu0 0
    %127 = vmatprep.subr.bf16.mxu0 0
    %128 = vmatpush2.bf16.msra.mxu0 0
    %129 = vmatprep.subr.bf16.mxu0 0
    %130 = vmatpush2.bf16.msra.mxu0 0
    %131 = vmatprep.subr.bf16.mxu0 0
    %132 = vmatpush2.bf16.msra.mxu0 0
    %133 = vmatprep.mubr.bf16.mxu0 0
    %134 = vmatmul.mubr.bf16.gmra.mxu0 %v99
    %v135 = vpop.f32.mrf.mxu0
    %v136 = vadd.f32 %v89, %v135
    %v137 = vpop.f32.mrf.mxu0
    %v138 = vpop.f32.mrf.mxu0
    %v139 = vpop.f32.mrf.mxu0
    %140 = vdwg.mxu0
    %v141 = vtanh.pop %v136
    %v142 = vpack.c.bf16 %v141, %v141
    %v143 = vld [vmem:[#allocation7] sm:$0xf]
    %v144 = vld [vmem:[#allocation7 + $0x4] sm:$0xf]
    %v145 = vld [vmem:[#allocation7 + $0x8] sm:$0xf]
    %v146 = vld [vmem:[#allocation7 + $0xc] sm:$0xf]
    %v147 = vld [vmem:[#allocation7 + $0x10] sm:$0xf]
    %v148 = vld [vmem:[#allocation7 + $0x14] sm:$0xf]
    %v149 = vld [vmem:[#allocation7 + $0x18] sm:$0xf]
    %v150 = vld [vmem:[#allocation7 + $0x1c] sm:$0xf]
    %v151 = vld [vmem:[#allocation7 + $0x20] sm:$0xf]
    %v152 = vld [vmem:[#allocation7 + $0x24] sm:$0xf]
    %v153 = vld [vmem:[#allocation7 + $0x28] sm:$0xf]
    %v154 = vld [vmem:[#allocation7 + $0x2c] sm:$0xf]
    %v155 = vld [vmem:[#allocation7 + $0x30] sm:$0xf]
    %v156 = vld [vmem:[#allocation7 + $0x34] sm:$0xf]
    %v157 = vld [vmem:[#allocation7 + $0x38] sm:$0xf]
    %v158 = vld [vmem:[#allocation7 + $0x3c] sm:$0xf]
    %v159 = vld [vmem:[%s4] sm:$0x1]
    %v161 = vlaneseq
    %v162 = vshrl.u32 %v161, 7
    %v163 = vsub.s32 0, %v162
    %v164 = vrot.slane %v159, %v163
    %v182 = vunpack.c.l.b16 %v143
    %v183 = vunpack.c.l.b16 %v144
    %v184 = vunpack.c.l.b16 %v145
    %v185 = vunpack.c.l.b16 %v146
    %v186 = vunpack.c.l.b16 %v147
    %v187 = vunpack.c.l.b16 %v148
    %v188 = vunpack.c.l.b16 %v149
    %v189 = vunpack.c.l.b16 %v150
    %v190 = vunpack.c.l.b16 %v151
    %v191 = vunpack.c.l.b16 %v152
    %v192 = vunpack.c.l.b16 %v153
    %v193 = vunpack.c.l.b16 %v154
    %v194 = vunpack.c.l.b16 %v155
    %v195 = vunpack.c.l.b16 %v156
    %v196 = vunpack.c.l.b16 %v157
    %v197 = vunpack.c.l.b16 %v158
    %v198 = vpack.c.b16 %v183, %v182
    %v199 = vpack.c.b16 %v185, %v184
    %v200 = vpack.c.b16 %v187, %v186
    %v201 = vpack.c.b16 %v189, %v188
    %v202 = vpack.c.b16 %v191, %v190
    %v203 = vpack.c.b16 %v193, %v192
    %v204 = vpack.c.b16 %v195, %v194
    %v205 = vpack.c.b16 %v197, %v196
    %214 = vmatprep.subr.bf16.mxu0 0
    %215 = vmatpush1.bf16.msra.mxu0 %v205
    %216 = vmatprep.subr.bf16.mxu0 0
    %217 = vmatpush1.bf16.msra.mxu0 %v204
    %218 = vmatprep.subr.bf16.mxu0 0
    %219 = vmatpush1.bf16.msra.mxu0 %v203
    %220 = vmatprep.subr.bf16.mxu0 0
    %221 = vmatpush1.bf16.msra.mxu0 %v202
    %222 = vmatprep.subr.bf16.mxu0 0
    %223 = vmatpush1.bf16.msra.mxu0 %v201
    %224 = vmatprep.subr.bf16.mxu0 0
    %225 = vmatpush1.bf16.msra.mxu0 %v200
    %226 = vmatprep.subr.bf16.mxu0 0
    %227 = vmatpush1.bf16.msra.mxu0 %v199
    %228 = vmatprep.subr.bf16.mxu0 0
    %229 = vmatpush1.bf16.msra.mxu0 %v198
    %230 = vmatprep.subr.bf16.mxu0 0
    %231 = vmatpush2.bf16.msra.mxu0 0
    %232 = vmatprep.subr.bf16.mxu0 0
    %233 = vmatpush2.bf16.msra.mxu0 0
    %234 = vmatprep.subr.bf16.mxu0 0
    %235 = vmatpush2.bf16.msra.mxu0 0
    %236 = vmatprep.subr.bf16.mxu0 0
    %237 = vmatpush2.bf16.msra.mxu0 0
    %238 = vmatprep.subr.bf16.mxu0 0
    %239 = vmatpush2.bf16.msra.mxu0 0
    %240 = vmatprep.subr.bf16.mxu0 0
    %241 = vmatpush2.bf16.msra.mxu0 0
    %242 = vmatprep.subr.bf16.mxu0 0
    %243 = vmatpush2.bf16.msra.mxu0 0
    %244 = vmatprep.subr.bf16.mxu0 0
    %245 = vmatpush2.bf16.msra.mxu0 0
    %246 = vmatprep.mubr.bf16.mxu0 0
    %247 = vmatmul.mubr.bf16.gmra.mxu0 %v142
    %v248 = vpop.f32.mrf.mxu0
    %v249 = vadd.f32 %v164, %v248
    %v250 = vpop.f32.mrf.mxu0
    %v251 = vpop.f32.mrf.mxu0
    %v252 = vpop.f32.mrf.mxu0
    %253 = vdwg.mxu0
    %v254 = vtanh.pop %v249
    %v255 = vpack.c.bf16 %v254, %v254
    %v256 = vld [vmem:[#allocation8] sm:$0xf]
    %v257 = vld [vmem:[#allocation8 + $0x4] sm:$0xf]
    %v258 = vld [vmem:[#allocation8 + $0x8] sm:$0xf]
    %v259 = vld [vmem:[#allocation8 + $0xc] sm:$0xf]
    %v260 = vld [vmem:[#allocation8 + $0x10] sm:$0xf]
    %v261 = vld [vmem:[#allocation8 + $0x14] sm:$0xf]
    %v262 = vld [vmem:[#allocation8 + $0x18] sm:$0xf]
    %v263 = vld [vmem:[#allocation8 + $0x1c] sm:$0xf]
    %v264 = vld [vmem:[#allocation8 + $0x20] sm:$0xf]
    %v265 = vld [vmem:[#allocation8 + $0x24] sm:$0xf]
    %v266 = vld [vmem:[#allocation8 + $0x28] sm:$0xf]
    %v267 = vld [vmem:[#allocation8 + $0x2c] sm:$0xf]
    %v268 = vld [vmem:[#allocation8 + $0x30] sm:$0xf]
    %v269 = vld [vmem:[#allocation8 + $0x34] sm:$0xf]
    %v270 = vld [vmem:[#allocation8 + $0x38] sm:$0xf]
    %v271 = vld [vmem:[#allocation8 + $0x3c] sm:$0xf]
    %v272 = vld [vmem:[%s6] sm:$0x1]
    %v274 = vlaneseq
    %v275 = vshrl.u32 %v274, 7
    %v276 = vsub.s32 0, %v275
    %v277 = vrot.slane %v272, %v276
    %v295 = vunpack.c.l.b16 %v256
    %v296 = vunpack.c.l.b16 %v257
    %v297 = vunpack.c.l.b16 %v258
    %v298 = vunpack.c.l.b16 %v259
    %v299 = vunpack.c.l.b16 %v260
    %v300 = vunpack.c.l.b16 %v261
    %v301 = vunpack.c.l.b16 %v262
    %v302 = vunpack.c.l.b16 %v263
    %v303 = vunpack.c.l.b16 %v264
    %v304 = vunpack.c.l.b16 %v265
    %v305 = vunpack.c.l.b16 %v266
    %v306 = vunpack.c.l.b16 %v267
    %v307 = vunpack.c.l.b16 %v268
    %v308 = vunpack.c.l.b16 %v269
    %v309 = vunpack.c.l.b16 %v270
    %v310 = vunpack.c.l.b16 %v271
    %v311 = vpack.c.b16 %v296, %v295
    %v312 = vpack.c.b16 %v298, %v297
    %v313 = vpack.c.b16 %v300, %v299
    %v314 = vpack.c.b16 %v302, %v301
    %v315 = vpack.c.b16 %v304, %v303
    %v316 = vpack.c.b16 %v306, %v305
    %v317 = vpack.c.b16 %v308, %v307
    %v318 = vpack.c.b16 %v310, %v309
    %327 = vmatprep.subr.bf16.mxu0 0
    %328 = vmatpush1.bf16.msra.mxu0 %v318
    %329 = vmatprep.subr.bf16.mxu0 0
    %330 = vmatpush1.bf16.msra.mxu0 %v317
    %331 = vmatprep.subr.bf16.mxu0 0
    %332 = vmatpush1.bf16.msra.mxu0 %v316
    %333 = vmatprep.subr.bf16.mxu0 0
    %334 = vmatpush1.bf16.msra.mxu0 %v315
    %335 = vmatprep.subr.bf16.mxu0 0
    %336 = vmatpush1.bf16.msra.mxu0 %v314
    %337 = vmatprep.subr.bf16.mxu0 0
    %338 = vmatpush1.bf16.msra.mxu0 %v313
    %339 = vmatprep.subr.bf16.mxu0 0
    %340 = vmatpush1.bf16.msra.mxu0 %v312
    %341 = vmatprep.subr.bf16.mxu0 0
    %342 = vmatpush1.bf16.msra.mxu0 %v311
    %343 = vmatprep.subr.bf16.mxu0 0
    %344 = vmatpush2.bf16.msra.mxu0 0
    %345 = vmatprep.subr.bf16.mxu0 0
    %346 = vmatpush2.bf16.msra.mxu0 0
    %347 = vmatprep.subr.bf16.mxu0 0
    %348 = vmatpush2.bf16.msra.mxu0 0
    %349 = vmatprep.subr.bf16.mxu0 0
    %350 = vmatpush2.bf16.msra.mxu0 0
    %351 = vmatprep.subr.bf16.mxu0 0
    %352 = vmatpush2.bf16.msra.mxu0 0
    %353 = vmatprep.subr.bf16.mxu0 0
    %354 = vmatpush2.bf16.msra.mxu0 0
    %355 = vmatprep.subr.bf16.mxu0 0
    %356 = vmatpush2.bf16.msra.mxu0 0
    %357 = vmatprep.subr.bf16.mxu0 0
    %358 = vmatpush2.bf16.msra.mxu0 0
    %359 = vmatprep.mubr.bf16.mxu0 0
    %360 = vmatmul.mubr.bf16.gmra.mxu0 %v255
    %v361 = vpop.f32.mrf.mxu0
    %v362 = vadd.f32 %v277, %v361
    %v363 = vpop.f32.mrf.mxu0
    %v364 = vpop.f32.mrf.mxu0
    %v365 = vpop.f32.mrf.mxu0
    %366 = vdwg.mxu0
    %v367 = vtanh.pop %v362
    %368 = vst [vmem:[#allocation10] sm:$0xff] %v367
    // Predicated region
    $region46: #{tpu_custom_call.1} parent=1 // pred_check
      _
    $region47: #{tpu_custom_call.1} parent=1 // pred_check_branch
      %370 = sbr.rel (0) target = $region49
    $region48: #{tpu_custom_call.1} parent=1 // pred_region
      %s372 = ssub.s32 128, 128
      %373 = vsyncadd [#allocation4], %s372
      %s375 = sshll.u32 [#allocation10], 4
      %s376 = int_to_ptr.vmem [resolvable:$true] %s375
      %378 = dma.vmem_to_hbm [thread:$0]  %s376, 128, %s7, [#allocation4]
    $region49: #{tpu_custom_call.1} parent=1 // pred_fallthru
      _
    // Predicated region
    $region50: #{tpu_custom_call.1} parent=1 // pred_check
      _
    $region51: #{tpu_custom_call.1} parent=1 // pred_check_branch
      %380 = sbr.rel (0) target = $region53
    $region52: #{tpu_custom_call.1} parent=1 // pred_region
      %381 = dma.done [#allocation4], 128
    $region53: #{tpu_custom_call.1} parent=1 // pred_fallthru
      _
    %382 = vsyncpa [#allocation3], 1
    %383 = vsyncpa [#allocation6], 1
    %384 = vsyncpa [#allocation9], 1
    %385 = vsyncpa [#allocation4], 1

</llo_original>
